<compile_context>
chip_gen: v5e
topology: v5e:2x2
jax: 0.10.0
libtpu: 0.0.40
codegen_flags: <defaults>
</compile_context>

<pallas_src>
import jax
import jax.numpy as jnp
from jax.experimental import pallas as pl
from jax.experimental.pallas import tpu as pltpu


def gap_conv1x1_kernel(x_ref, w_ref, b_ref, o_ref):
    # x_ref: (1, C, HW)  one batch element (C on sublanes, HW on lanes), native dtype
    # w_ref: (O, C)      raw 1x1-conv weight, lane-dense rows, native dtype
    # b_ref: (1, O)      bias (lane-dense)
    # o_ref: (1, 1, O)   lane-dense output row for this batch element
    hw = x_ref.shape[-1]                     # static block extent -> Python int
    x = x_ref[0]                             # (C, HW), no dtype cast of the big tile

    # Contract the 960-deep channel axis on the MXU first; accumulation is f32
    # via preferred_element_type, so no materialized f32 copy of the inputs.
    p = jnp.dot(w_ref[...], x, preferred_element_type=jnp.float32)    # (O, HW) f32

    # Tiny cross-lane reduce of the (O, HW) tile on the XLU.
    s = jnp.sum(p, axis=-1, keepdims=True)                            # (O, 1) f32

    # 1/HW mean scale + bias on 40 values (free on the VPU), emitted lane-dense.
    y = s.T * (1.0 / hw) + b_ref[...].astype(jnp.float32)             # (1, O) f32
    o_ref[0] = y.astype(o_ref.dtype)


def mean_conv2d_1x1(x_nchw, weight_oc11, bias_o):
    """x_nchw: (B, C, H, W); weight: (O, C, 1, 1); bias: (O,). Returns (B, O, 1, 1)."""
    B, C, H, W = x_nchw.shape
    O = weight_oc11.shape[0]
    HW = H * W

    # Free contiguous reshape (no NCHW->NHWC transpose, no extra HBM pass).
    x_bc_hw = x_nchw.reshape(B, C, HW)
    # Raw weight, lane-dense (C = 960 on the lane axis). No pre-scaling here.
    w_oc = weight_oc11.reshape(O, C)
    b_1o = bias_o.reshape(1, O)

    out = pl.pallas_call(
        gap_conv1x1_kernel,
        out_shape=jax.ShapeDtypeStruct((B, 1, O), x_nchw.dtype),
        grid=(B,),
        in_specs=[
            pl.BlockSpec((1, C, HW), lambda b: (b, 0, 0)),
            pl.BlockSpec((O, C), lambda b: (0, 0)),
            pl.BlockSpec((1, O), lambda b: (0, 0)),
        ],
        out_specs=pl.BlockSpec((1, 1, O), lambda b: (b, 0, 0)),
        compiler_params=pltpu.CompilerParams(
            dimension_semantics=("parallel",)),
    )(x_bc_hw, w_oc, b_1o)

    return out.reshape(B, O, 1, 1)


if __name__ == "__main__":
    # Shapes implied by the module's forward: x285 is (1, 960, 14, 14).
    B, C, H, W = 1, 960, 14, 14
    O = 40

    key = jax.random.PRNGKey(0)
    kx, kw, kb = jax.random.split(key, 3)

    x = jax.random.normal(kx, (B, C, H, W), dtype=jnp.float32)
    # Deterministic synthetic parameters (shapes from Conv2d(960, 40, 1)).
    weight = jax.random.normal(kw, (O, C, 1, 1), dtype=jnp.float32) * 0.02
    bias = jax.random.normal(kb, (O,), dtype=jnp.float32) * 0.02

    y = mean_conv2d_1x1(x, weight, bias)
    y = jax.block_until_ready(y)

    # Reference check in plain JAX (mean first, then 1x1 conv, as in the module).
    ref = jnp.mean(x, axis=(2, 3), keepdims=True)                        # (B, C, 1, 1)
    ref = jnp.einsum("bcij,oc->boij", ref, weight.reshape(O, C)) + bias.reshape(1, O, 1, 1)

    assert y.shape == (B, O, 1, 1), y.shape
    assert jnp.allclose(y, ref, rtol=1e-5, atol=1e-5), float(jnp.max(jnp.abs(y - ref)))

    print("KERNEL_OK")
</pallas_src>

<mosaic_0001>
module attributes {stable_mosaic.version = 11 : i64} {
  func.func @gap_conv1x1_kernel(%arg0: i32, %arg1: memref<1x960x196xf32, #tpu.memory_space<vmem>>, %arg2: memref<40x960xf32, #tpu.memory_space<vmem>>, %arg3: memref<1x40xf32, #tpu.memory_space<vmem>>, %arg4: memref<1x1x40xf32, #tpu.memory_space<vmem>>) attributes {dimension_semantics = [#tpu.dimension_semantics<parallel>], iteration_bounds = array<i64: 1>, scalar_prefetch = 0 : i64, scratch_operands = 0 : i64, tpu.core_type = #tpu.core_type<tc>, window_params = [{transform_indices = @transform_0, window_bounds = array<i64: 1, 960, 196>}, {pipeline_mode = #tpu.pipeline_mode<synchronous>, transform_indices = @transform_1, window_bounds = array<i64: 40, 960>}, {pipeline_mode = #tpu.pipeline_mode<synchronous>, transform_indices = @transform_2, window_bounds = array<i64: 1, 40>}, {transform_indices = @transform_3, window_bounds = array<i64: 1, 1, 40>}]} {
    %c0 = arith.constant 0 : index
    %c0_0 = arith.constant 0 : index
    %c0_1 = arith.constant 0 : index
    %0 = vector.load %arg1[%c0, %c0_0, %c0_1] : memref<1x960x196xf32, #tpu.memory_space<vmem>>, vector<1x960x196xf32>
    %1 = vector.shape_cast %0 : vector<1x960x196xf32> to vector<960x196xf32>
    %c0_2 = arith.constant 0 : index
    %c0_3 = arith.constant 0 : index
    %2 = vector.load %arg2[%c0_2, %c0_3] : memref<40x960xf32, #tpu.memory_space<vmem>>, vector<40x960xf32>
    %cst = arith.constant dense<0.000000e+00> : vector<40x196xf32>
    %3 = tpu.matmul %2, %1, %cst {dimension_numbers = #tpu.dot_dimension_numbers<[1], [0], [0], [1], [0, 0, 1, 1], [], []>} : vector<40x960xf32>, vector<960x196xf32>, vector<40x196xf32> -> vector<40x196xf32>
    %cst_4 = arith.constant dense<0.000000e+00> : vector<40xf32>
    %4 = vector.multi_reduction <add>, %3, %cst_4 [1] : vector<40x196xf32> to vector<40xf32>
    %5 = vector.shape_cast %4 : vector<40xf32> to vector<40x1xf32>
    %6 = tpu.transpose %5, [1, 0] : vector<40x1xf32> -> vector<1x40xf32>
    %cst_5 = arith.constant 0.00510204071 : f32
    %7 = vector.broadcast %cst_5 : f32 to vector<1x40xf32>
    %8 = arith.mulf %6, %7 : vector<1x40xf32>
    %c0_6 = arith.constant 0 : index
    %c0_7 = arith.constant 0 : index
    %9 = vector.load %arg3[%c0_6, %c0_7] : memref<1x40xf32, #tpu.memory_space<vmem>>, vector<1x40xf32>
    %10 = arith.addf %8, %9 : vector<1x40xf32>
    %c0_8 = arith.constant 0 : index
    %c0_9 = arith.constant 0 : index
    %c0_10 = arith.constant 0 : index
    %11 = vector.load %arg4[%c0_8, %c0_9, %c0_10] : memref<1x1x40xf32, #tpu.memory_space<vmem>>, vector<1x1x40xf32>
    %12 = vector.shape_cast %11 : vector<1x1x40xf32> to vector<1x40xf32>
    %13 = vector.shape_cast %10 : vector<1x40xf32> to vector<1x1x40xf32>
    tpu.vector_store %arg4[%c0_8, %c0_9, %c0_10], %13 {strides = array<i32>} : memref<1x1x40xf32, #tpu.memory_space<vmem>>, vector<1x1x40xf32>,
    return
  }
  func.func @transform_0(%arg0: i32) -> (i32, i32, i32) {
    %c0_i32 = arith.constant 0 : i32
    %c0_i32_0 = arith.constant 0 : i32
    %c0_i32_1 = arith.constant 0 : i32
    return %arg0, %c0_i32, %c0_i32_0 : i32, i32, i32
  }
  func.func @transform_1(%arg0: i32) -> (i32, i32) {
    %c0_i32 = arith.constant 0 : i32
    %c0_i32_0 = arith.constant 0 : i32
    %c0_i32_1 = arith.constant 0 : i32
    return %c0_i32, %c0_i32_0 : i32, i32
  }
  func.func @transform_2(%arg0: i32) -> (i32, i32) {
    %c0_i32 = arith.constant 0 : i32
    %c0_i32_0 = arith.constant 0 : i32
    %c0_i32_1 = arith.constant 0 : i32
    return %c0_i32, %c0_i32_0 : i32, i32
  }
  func.func @transform_3(%arg0: i32) -> (i32, i32, i32) {
    %c0_i32 = arith.constant 0 : i32
    %c0_i32_0 = arith.constant 0 : i32
    %c0_i32_1 = arith.constant 0 : i32
    return %arg0, %c0_i32, %c0_i32_0 : i32, i32, i32
  }
}

</mosaic_0001>

<llo_original>
// kernel: tpu_custom_call.1
$region0: #{tpu_custom_call.1}
  #allocation0 [shape = 'u32[]', space=smem, size = 0x4, offset = 0x4, fixed_abs, tag = 'smem constant byte address 0x4 - core index']
  #allocation1 [shape = 'u32[72,128]{1,0:T(1,128)}', space=vmem, size = 0x9000, scoped, tag = 'internal scratch']
  %s0 = inlined_call_operand.vmem [shape: f32[1,960,196], index: 0, kind: input, shape index: {}]
  %s1 = inlined_call_operand.vmem [shape: f32[40,960], index: 1, kind: input, shape index: {}]
  %s2 = inlined_call_operand.vmem [shape: f32[1,40], index: 2, kind: input, shape index: {}]
  %s3 = inlined_call_operand.hbm [shape: f32[1,1,40], index: 3, kind: output, shape index: {}]
  %s4 = sld [smem:[#allocation0]]
  $region22: #{tpu_custom_call.1} parent=0
    _
  %s6 = ssub.s32 1, %s4
  %s7 = scalar_select 0, %s6, %s4
  $region1: #{tpu_custom_call.1} parent=0
    #allocation2 [shape = 'u8[512]{0}', space=vmem, size = 0x400, scoped, tag = 'output window, operand 0, single buffered']
    #allocation3 [shape = 's32[1]{0}', space=sflag, size = 0x4, scoped, tag = 'scoped memory for tpu_custom_call.1']
    %8 = vsyncpa [#allocation3], 0
    // Predicated region
    $region2: #{tpu_custom_call.1} parent=1 // pred_check
      _
    $region3: #{tpu_custom_call.1} parent=1 // pred_check_branch
      %10 = sbr.rel (0) target = $region5
    $region4: #{tpu_custom_call.1} parent=1 // pred_region
      _
    $region5: #{tpu_custom_call.1} parent=1 // pred_fallthru
      _
    // Predicated region
    $region6: #{tpu_custom_call.1} parent=1 // pred_check
      _
    $region7: #{tpu_custom_call.1} parent=1 // pred_check_branch
      %12 = sbr.rel (0) target = $region9
    $region8: #{tpu_custom_call.1} parent=1 // pred_region
      _
    $region9: #{tpu_custom_call.1} parent=1 // pred_fallthru
      _
    // Predicated region
    $region10: #{tpu_custom_call.1} parent=1 // pred_check
      _
    $region11: #{tpu_custom_call.1} parent=1 // pred_check_branch
      %14 = sbr.rel (0) target = $region13
    $region12: #{tpu_custom_call.1} parent=1 // pred_region
      _
    $region13: #{tpu_custom_call.1} parent=1 // pred_fallthru
      _
    %v15 = vld [vmem:[%s0] sm:$0xff]
    %v16 = vld [vmem:[%s0 + $0x8] sm:$0xff]
    %v17 = vld [vmem:[%s0 + $0x10] sm:$0xff]
    %v18 = vld [vmem:[%s0 + $0x18] sm:$0xff]
    %v19 = vld [vmem:[%s0 + $0x20] sm:$0xff]
    %v20 = vld [vmem:[%s0 + $0x28] sm:$0xff]
    %v21 = vld [vmem:[%s0 + $0x30] sm:$0xff]
    %v22 = vld [vmem:[%s0 + $0x38] sm:$0xff]
    %v23 = vld [vmem:[%s0 + $0x40] sm:$0xff]
    %v24 = vld [vmem:[%s0 + $0x48] sm:$0xff]
    %v25 = vld [vmem:[%s0 + $0x50] sm:$0xff]
    %v26 = vld [vmem:[%s0 + $0x58] sm:$0xff]
    %v27 = vld [vmem:[%s0 + $0x60] sm:$0xff]
    %v28 = vld [vmem:[%s0 + $0x68] sm:$0xff]
    %v29 = vld [vmem:[%s0 + $0x70] sm:$0xff]
    %v30 = vld [vmem:[%s0 + $0x78] sm:$0xff]
    %v31 = vld [vmem:[%s0 + $0x80] sm:$0xff]
    %v32 = vld [vmem:[%s0 + $0x88] sm:$0xff]
    %v33 = vld [vmem:[%s0 + $0x90] sm:$0xff]
    %v34 = vld [vmem:[%s0 + $0x98] sm:$0xff]
    %v35 = vld [vmem:[%s0 + $0xa0] sm:$0xff]
    %v36 = vld [vmem:[%s0 + $0xa8] sm:$0xff]
    %v37 = vld [vmem:[%s0 + $0xb0] sm:$0xff]
    %v38 = vld [vmem:[%s0 + $0xb8] sm:$0xff]
    %v39 = vld [vmem:[%s0 + $0xc0] sm:$0xff]
    %v40 = vld [vmem:[%s0 + $0xc8] sm:$0xff]
    %v41 = vld [vmem:[%s0 + $0xd0] sm:$0xff]
    %v42 = vld [vmem:[%s0 + $0xd8] sm:$0xff]
    %v43 = vld [vmem:[%s0 + $0xe0] sm:$0xff]
    %v44 = vld [vmem:[%s0 + $0xe8] sm:$0xff]
    %v45 = vld [vmem:[%s0 + $0xf0] sm:$0xff]
    %v46 = vld [vmem:[%s0 + $0xf8] sm:$0xff]
    %v47 = vld [vmem:[%s0 + $0x100] sm:$0xff]
    %v48 = vld [vmem:[%s0 + $0x108] sm:$0xff]
    %v49 = vld [vmem:[%s0 + $0x110] sm:$0xff]
    %v50 = vld [vmem:[%s0 + $0x118] sm:$0xff]
    %v51 = vld [vmem:[%s0 + $0x120] sm:$0xff]
    %v52 = vld [vmem:[%s0 + $0x128] sm:$0xff]
    %v53 = vld [vmem:[%s0 + $0x130] sm:$0xff]
    %v54 = vld [vmem:[%s0 + $0x138] sm:$0xff]
    %v55 = vld [vmem:[%s0 + $0x140] sm:$0xff]
    %v56 = vld [vmem:[%s0 + $0x148] sm:$0xff]
    %v57 = vld [vmem:[%s0 + $0x150] sm:$0xff]
    %v58 = vld [vmem:[%s0 + $0x158] sm:$0xff]
    %v59 = vld [vmem:[%s0 + $0x160] sm:$0xff]
    %v60 = vld [vmem:[%s0 + $0x168] sm:$0xff]
    %v61 = vld [vmem:[%s0 + $0x170] sm:$0xff]
    %v62 = vld [vmem:[%s0 + $0x178] sm:$0xff]
    %v63 = vld [vmem:[%s0 + $0x180] sm:$0xff]
    %v64 = vld [vmem:[%s0 + $0x188] sm:$0xff]
    %v65 = vld [vmem:[%s0 + $0x190] sm:$0xff]
    %v66 = vld [vmem:[%s0 + $0x198] sm:$0xff]
    %v67 = vld [vmem:[%s0 + $0x1a0] sm:$0xff]
    %v68 = vld [vmem:[%s0 + $0x1a8] sm:$0xff]
    %v69 = vld [vmem:[%s0 + $0x1b0] sm:$0xff]
    %v70 = vld [vmem:[%s0 + $0x1b8] sm:$0xff]
    %v71 = vld [vmem:[%s0 + $0x1c0] sm:$0xff]
    %v72 = vld [vmem:[%s0 + $0x1c8] sm:$0xff]
    %v73 = vld [vmem:[%s0 + $0x1d0] sm:$0xff]
    %v74 = vld [vmem:[%s0 + $0x1d8] sm:$0xff]
    %v75 = vld [vmem:[%s0 + $0x1e0] sm:$0xff]
    %v76 = vld [vmem:[%s0 + $0x1e8] sm:$0xff]
    %v77 = vld [vmem:[%s0 + $0x1f0] sm:$0xff]
    %v78 = vld [vmem:[%s0 + $0x1f8] sm:$0xff]
    %v79 = vld [vmem:[%s0 + $0x200] sm:$0xff]
    %v80 = vld [vmem:[%s0 + $0x208] sm:$0xff]
    %v81 = vld [vmem:[%s0 + $0x210] sm:$0xff]
    %v82 = vld [vmem:[%s0 + $0x218] sm:$0xff]
    %v83 = vld [vmem:[%s0 + $0x220] sm:$0xff]
    %v84 = vld [vmem:[%s0 + $0x228] sm:$0xff]
    %v85 = vld [vmem:[%s0 + $0x230] sm:$0xff]
    %v86 = vld [vmem:[%s0 + $0x238] sm:$0xff]
    %v87 = vld [vmem:[%s0 + $0x240] sm:$0xff]
    %v88 = vld [vmem:[%s0 + $0x248] sm:$0xff]
    %v89 = vld [vmem:[%s0 + $0x250] sm:$0xff]
    %v90 = vld [vmem:[%s0 + $0x258] sm:$0xff]
    %v91 = vld [vmem:[%s0 + $0x260] sm:$0xff]
    %v92 = vld [vmem:[%s0 + $0x268] sm:$0xff]
    %v93 = vld [vmem:[%s0 + $0x270] sm:$0xff]
    %v94 = vld [vmem:[%s0 + $0x278] sm:$0xff]
    %v95 = vld [vmem:[%s0 + $0x280] sm:$0xff]
    %v96 = vld [vmem:[%s0 + $0x288] sm:$0xff]
    %v97 = vld [vmem:[%s0 + $0x290] sm:$0xff]
    %v98 = vld [vmem:[%s0 + $0x298] sm:$0xff]
    %v99 = vld [vmem:[%s0 + $0x2a0] sm:$0xff]
    %v100 = vld [vmem:[%s0 + $0x2a8] sm:$0xff]
    %v101 = vld [vmem:[%s0 + $0x2b0] sm:$0xff]
    %v102 = vld [vmem:[%s0 + $0x2b8] sm:$0xff]
    %v103 = vld [vmem:[%s0 + $0x2c0] sm:$0xff]
    %v104 = vld [vmem:[%s0 + $0x2c8] sm:$0xff]
    %v105 = vld [vmem:[%s0 + $0x2d0] sm:$0xff]
    %v106 = vld [vmem:[%s0 + $0x2d8] sm:$0xff]
    %v107 = vld [vmem:[%s0 + $0x2e0] sm:$0xff]
    %v108 = vld [vmem:[%s0 + $0x2e8] sm:$0xff]
    %v109 = vld [vmem:[%s0 + $0x2f0] sm:$0xff]
    %v110 = vld [vmem:[%s0 + $0x2f8] sm:$0xff]
    %v111 = vld [vmem:[%s0 + $0x300] sm:$0xff]
    %v112 = vld [vmem:[%s0 + $0x308] sm:$0xff]
    %v113 = vld [vmem:[%s0 + $0x310] sm:$0xff]
    %v114 = vld [vmem:[%s0 + $0x318] sm:$0xff]
    %v115 = vld [vmem:[%s0 + $0x320] sm:$0xff]
    %v116 = vld [vmem:[%s0 + $0x328] sm:$0xff]
    %v117 = vld [vmem:[%s0 + $0x330] sm:$0xff]
    %v118 = vld [vmem:[%s0 + $0x338] sm:$0xff]
    %v119 = vld [vmem:[%s0 + $0x340] sm:$0xff]
    %v120 = vld [vmem:[%s0 + $0x348] sm:$0xff]
    %v121 = vld [vmem:[%s0 + $0x350] sm:$0xff]
    %v122 = vld [vmem:[%s0 + $0x358] sm:$0xff]
    %v123 = vld [vmem:[%s0 + $0x360] sm:$0xff]
    %v124 = vld [vmem:[%s0 + $0x368] sm:$0xff]
    %v125 = vld [vmem:[%s0 + $0x370] sm:$0xff]
    %v126 = vld [vmem:[%s0 + $0x378] sm:$0xff]
    %v127 = vld [vmem:[%s0 + $0x380] sm:$0xff]
    %v128 = vld [vmem:[%s0 + $0x388] sm:$0xff]
    %v129 = vld [vmem:[%s0 + $0x390] sm:$0xff]
    %v130 = vld [vmem:[%s0 + $0x398] sm:$0xff]
    %v131 = vld [vmem:[%s0 + $0x3a0] sm:$0xff]
    %v132 = vld [vmem:[%s0 + $0x3a8] sm:$0xff]
    %v133 = vld [vmem:[%s0 + $0x3b0] sm:$0xff]
    %v134 = vld [vmem:[%s0 + $0x3b8] sm:$0xff]
    %v135 = vld [vmem:[%s0 + $0x3c0] sm:$0xff]
    %v136 = vld [vmem:[%s0 + $0x3c8] sm:$0xff]
    %v137 = vld [vmem:[%s0 + $0x3d0] sm:$0xff]
    %v138 = vld [vmem:[%s0 + $0x3d8] sm:$0xff]
    %v139 = vld [vmem:[%s0 + $0x3e0] sm:$0xff]
    %v140 = vld [vmem:[%s0 + $0x3e8] sm:$0xff]
    %v141 = vld [vmem:[%s0 + $0x3f0] sm:$0xff]
    %v142 = vld [vmem:[%s0 + $0x3f8] sm:$0xff]
    %v143 = vld [vmem:[%s0 + $0x400] sm:$0xff]
    %v144 = vld [vmem:[%s0 + $0x408] sm:$0xff]
    %v145 = vld [vmem:[%s0 + $0x410] sm:$0xff]
    %v146 = vld [vmem:[%s0 + $0x418] sm:$0xff]
    %v147 = vld [vmem:[%s0 + $0x420] sm:$0xff]
    %v148 = vld [vmem:[%s0 + $0x428] sm:$0xff]
    %v149 = vld [vmem:[%s0 + $0x430] sm:$0xff]
    %v150 = vld [vmem:[%s0 + $0x438] sm:$0xff]
    %v151 = vld [vmem:[%s0 + $0x440] sm:$0xff]
    %v152 = vld [vmem:[%s0 + $0x448] sm:$0xff]
    %v153 = vld [vmem:[%s0 + $0x450] sm:$0xff]
    %v154 = vld [vmem:[%s0 + $0x458] sm:$0xff]
    %v155 = vld [vmem:[%s0 + $0x460] sm:$0xff]
    %v156 = vld [vmem:[%s0 + $0x468] sm:$0xff]
    %v157 = vld [vmem:[%s0 + $0x470] sm:$0xff]
    %v158 = vld [vmem:[%s0 + $0x478] sm:$0xff]
    %v159 = vld [vmem:[%s0 + $0x480] sm:$0xff]
    %v160 = vld [vmem:[%s0 + $0x488] sm:$0xff]
    %v161 = vld [vmem:[%s0 + $0x490] sm:$0xff]
    %v162 = vld [vmem:[%s0 + $0x498] sm:$0xff]
    %v163 = vld [vmem:[%s0 + $0x4a0] sm:$0xff]
    %v164 = vld [vmem:[%s0 + $0x4a8] sm:$0xff]
    %v165 = vld [vmem:[%s0 + $0x4b0] sm:$0xff]
    %v166 = vld [vmem:[%s0 + $0x4b8] sm:$0xff]
    %v167 = vld [vmem:[%s0 + $0x4c0] sm:$0xff]
    %v168 = vld [vmem:[%s0 + $0x4c8] sm:$0xff]
    %v169 = vld [vmem:[%s0 + $0x4d0] sm:$0xff]
    %v170 = vld [vmem:[%s0 + $0x4d8] sm:$0xff]
    %v171 = vld [vmem:[%s0 + $0x4e0] sm:$0xff]
    %v172 = vld [vmem:[%s0 + $0x4e8] sm:$0xff]
    %v173 = vld [vmem:[%s0 + $0x4f0] sm:$0xff]
    %v174 = vld [vmem:[%s0 + $0x4f8] sm:$0xff]
    %v175 = vld [vmem:[%s0 + $0x500] sm:$0xff]
    %v176 = vld [vmem:[%s0 + $0x508] sm:$0xff]
    %v177 = vld [vmem:[%s0 + $0x510] sm:$0xff]
    %v178 = vld [vmem:[%s0 + $0x518] sm:$0xff]
    %v179 = vld [vmem:[%s0 + $0x520] sm:$0xff]
    %v180 = vld [vmem:[%s0 + $0x528] sm:$0xff]
    %v181 = vld [vmem:[%s0 + $0x530] sm:$0xff]
    %v182 = vld [vmem:[%s0 + $0x538] sm:$0xff]
    %v183 = vld [vmem:[%s0 + $0x540] sm:$0xff]
    %v184 = vld [vmem:[%s0 + $0x548] sm:$0xff]
    %v185 = vld [vmem:[%s0 + $0x550] sm:$0xff]
    %v186 = vld [vmem:[%s0 + $0x558] sm:$0xff]
    %v187 = vld [vmem:[%s0 + $0x560] sm:$0xff]
    %v188 = vld [vmem:[%s0 + $0x568] sm:$0xff]
    %v189 = vld [vmem:[%s0 + $0x570] sm:$0xff]
    %v190 = vld [vmem:[%s0 + $0x578] sm:$0xff]
    %v191 = vld [vmem:[%s0 + $0x580] sm:$0xff]
    %v192 = vld [vmem:[%s0 + $0x588] sm:$0xff]
    %v193 = vld [vmem:[%s0 + $0x590] sm:$0xff]
    %v194 = vld [vmem:[%s0 + $0x598] sm:$0xff]
    %v195 = vld [vmem:[%s0 + $0x5a0] sm:$0xff]
    %v196 = vld [vmem:[%s0 + $0x5a8] sm:$0xff]
    %v197 = vld [vmem:[%s0 + $0x5b0] sm:$0xff]
    %v198 = vld [vmem:[%s0 + $0x5b8] sm:$0xff]
    %v199 = vld [vmem:[%s0 + $0x5c0] sm:$0xff]
    %v200 = vld [vmem:[%s0 + $0x5c8] sm:$0xff]
    %v201 = vld [vmem:[%s0 + $0x5d0] sm:$0xff]
    %v202 = vld [vmem:[%s0 + $0x5d8] sm:$0xff]
    %v203 = vld [vmem:[%s0 + $0x5e0] sm:$0xff]
    %v204 = vld [vmem:[%s0 + $0x5e8] sm:$0xff]
    %v205 = vld [vmem:[%s0 + $0x5f0] sm:$0xff]
    %v206 = vld [vmem:[%s0 + $0x5f8] sm:$0xff]
    %v207 = vld [vmem:[%s0 + $0x600] sm:$0xff]
    %v208 = vld [vmem:[%s0 + $0x608] sm:$0xff]
    %v209 = vld [vmem:[%s0 + $0x610] sm:$0xff]
    %v210 = vld [vmem:[%s0 + $0x618] sm:$0xff]
    %v211 = vld [vmem:[%s0 + $0x620] sm:$0xff]
    %v212 = vld [vmem:[%s0 + $0x628] sm:$0xff]
    %v213 = vld [vmem:[%s0 + $0x630] sm:$0xff]
    %v214 = vld [vmem:[%s0 + $0x638] sm:$0xff]
    %v215 = vld [vmem:[%s0 + $0x640] sm:$0xff]
    %v216 = vld [vmem:[%s0 + $0x648] sm:$0xff]
    %v217 = vld [vmem:[%s0 + $0x650] sm:$0xff]
    %v218 = vld [vmem:[%s0 + $0x658] sm:$0xff]
    %v219 = vld [vmem:[%s0 + $0x660] sm:$0xff]
    %v220 = vld [vmem:[%s0 + $0x668] sm:$0xff]
    %v221 = vld [vmem:[%s0 + $0x670] sm:$0xff]
    %v222 = vld [vmem:[%s0 + $0x678] sm:$0xff]
    %v223 = vld [vmem:[%s0 + $0x680] sm:$0xff]
    %v224 = vld [vmem:[%s0 + $0x688] sm:$0xff]
    %v225 = vld [vmem:[%s0 + $0x690] sm:$0xff]
    %v226 = vld [vmem:[%s0 + $0x698] sm:$0xff]
    %v227 = vld [vmem:[%s0 + $0x6a0] sm:$0xff]
    %v228 = vld [vmem:[%s0 + $0x6a8] sm:$0xff]
    %v229 = vld [vmem:[%s0 + $0x6b0] sm:$0xff]
    %v230 = vld [vmem:[%s0 + $0x6b8] sm:$0xff]
    %v231 = vld [vmem:[%s0 + $0x6c0] sm:$0xff]
    %v232 = vld [vmem:[%s0 + $0x6c8] sm:$0xff]
    %v233 = vld [vmem:[%s0 + $0x6d0] sm:$0xff]
    %v234 = vld [vmem:[%s0 + $0x6d8] sm:$0xff]
    %v235 = vld [vmem:[%s0 + $0x6e0] sm:$0xff]
    %v236 = vld [vmem:[%s0 + $0x6e8] sm:$0xff]
    %v237 = vld [vmem:[%s0 + $0x6f0] sm:$0xff]
    %v238 = vld [vmem:[%s0 + $0x6f8] sm:$0xff]
    %v239 = vld [vmem:[%s0 + $0x700] sm:$0xff]
    %v240 = vld [vmem:[%s0 + $0x708] sm:$0xff]
    %v241 = vld [vmem:[%s0 + $0x710] sm:$0xff]
    %v242 = vld [vmem:[%s0 + $0x718] sm:$0xff]
    %v243 = vld [vmem:[%s0 + $0x720] sm:$0xff]
    %v244 = vld [vmem:[%s0 + $0x728] sm:$0xff]
    %v245 = vld [vmem:[%s0 + $0x730] sm:$0xff]
    %v246 = vld [vmem:[%s0 + $0x738] sm:$0xff]
    %v247 = vld [vmem:[%s0 + $0x740] sm:$0xff]
    %v248 = vld [vmem:[%s0 + $0x748] sm:$0xff]
    %v249 = vld [vmem:[%s0 + $0x750] sm:$0xff]
    %v250 = vld [vmem:[%s0 + $0x758] sm:$0xff]
    %v251 = vld [vmem:[%s0 + $0x760] sm:$0xff]
    %v252 = vld [vmem:[%s0 + $0x768] sm:$0xff]
    %v253 = vld [vmem:[%s0 + $0x770] sm:$0xff]
    %v254 = vld [vmem:[%s0 + $0x778] sm:$0xff]
    %v255 = vld [vmem:[%s1] sm:$0xff]
    %v256 = vld [vmem:[%s1 + $0x8] sm:$0xff]
    %v257 = vld [vmem:[%s1 + $0x10] sm:$0xff]
    %v258 = vld [vmem:[%s1 + $0x18] sm:$0xff]
    %v259 = vld [vmem:[%s1 + $0x20] sm:$0xff]
    %v260 = vld [vmem:[%s1 + $0x28] sm:$0xff]
    %v261 = vld [vmem:[%s1 + $0x30] sm:$0xff]
    %v262 = vld [vmem:[%s1 + $0x38] sm:$0xff]
    %v263 = vld [vmem:[%s1 + $0x40] sm:$0xff]
    %v264 = vld [vmem:[%s1 + $0x48] sm:$0xff]
    %v265 = vld [vmem:[%s1 + $0x50] sm:$0xff]
    %v266 = vld [vmem:[%s1 + $0x58] sm:$0xff]
    %v267 = vld [vmem:[%s1 + $0x60] sm:$0xff]
    %v268 = vld [vmem:[%s1 + $0x68] sm:$0xff]
    %v269 = vld [vmem:[%s1 + $0x70] sm:$0xff]
    %v270 = vld [vmem:[%s1 + $0x78] sm:$0xff]
    %v271 = vld [vmem:[%s1 + $0x80] sm:$0xff]
    %v272 = vld [vmem:[%s1 + $0x88] sm:$0xff]
    %v273 = vld [vmem:[%s1 + $0x90] sm:$0xff]
    %v274 = vld [vmem:[%s1 + $0x98] sm:$0xff]
    %v275 = vld [vmem:[%s1 + $0xa0] sm:$0xff]
    %v276 = vld [vmem:[%s1 + $0xa8] sm:$0xff]
    %v277 = vld [vmem:[%s1 + $0xb0] sm:$0xff]
    %v278 = vld [vmem:[%s1 + $0xb8] sm:$0xff]
    %v279 = vld [vmem:[%s1 + $0xc0] sm:$0xff]
    %v280 = vld [vmem:[%s1 + $0xc8] sm:$0xff]
    %v281 = vld [vmem:[%s1 + $0xd0] sm:$0xff]
    %v282 = vld [vmem:[%s1 + $0xd8] sm:$0xff]
    %v283 = vld [vmem:[%s1 + $0xe0] sm:$0xff]
    %v284 = vld [vmem:[%s1 + $0xe8] sm:$0xff]
    %v285 = vld [vmem:[%s1 + $0xf0] sm:$0xff]
    %v286 = vld [vmem:[%s1 + $0xf8] sm:$0xff]
    %v287 = vld [vmem:[%s1 + $0x100] sm:$0xff]
    %v288 = vld [vmem:[%s1 + $0x108] sm:$0xff]
    %v289 = vld [vmem:[%s1 + $0x110] sm:$0xff]
    %v290 = vld [vmem:[%s1 + $0x118] sm:$0xff]
    %v291 = vld [vmem:[%s1 + $0x120] sm:$0xff]
    %v292 = vld [vmem:[%s1 + $0x128] sm:$0xff]
    %v293 = vld [vmem:[%s1 + $0x130] sm:$0xff]
    %v294 = vld [vmem:[%s1 + $0x138] sm:$0xff]
    %vm295 = vcmask 523264
    %v297 = vsel %vm295, %v262, 0
    %v300 = vsel %vm295, %v270, 0
    %v303 = vsel %vm295, %v278, 0
    %v306 = vsel %vm295, %v286, 0
    %v309 = vsel %vm295, %v294, 0
    %311 = vmatpush.msra.mxu0 %v45
    %312 = vmatpush.msra.mxu0 %v43
    %313 = vmatpush.msra.mxu0 %v41
    %314 = vmatpush.msra.mxu0 %v39
    %315 = vmatpush.msra.mxu0 %v37
    %316 = vmatpush.msra.mxu0 %v35
    %317 = vmatpush.msra.mxu0 %v33
    %318 = vmatpush.msra.mxu0 %v31
    %319 = vmatpush.msra.mxu0 %v29
    %320 = vmatpush.msra.mxu0 %v27
    %321 = vmatpush.msra.mxu0 %v25
    %322 = vmatpush.msra.mxu0 %v23
    %323 = vmatpush.msra.mxu0 %v21
    %324 = vmatpush.msra.mxu0 %v19
    %325 = vmatpush.msra.mxu0 %v17
    %326 = vmatpush.msra.mxu0 %v15
    %327 = vmatmul.f32.gmra.mxu0 %v255
    %v328 = vpop.f32.mrf.mxu0
    %v329 = vadd.f32 0.0, %v328
    %330 = vmatmul.f32.gmra.mxu0 %v263
    %v331 = vpop.f32.mrf.mxu0
    %v332 = vadd.f32 0.0, %v331
    %333 = vmatmul.f32.gmra.mxu0 %v271
    %v334 = vpop.f32.mrf.mxu0
    %v335 = vadd.f32 0.0, %v334
    %336 = vmatmul.f32.gmra.mxu0 %v279
    %v337 = vpop.f32.mrf.mxu0
    %v338 = vadd.f32 0.0, %v337
    %339 = vmatmul.f32.gmra.mxu0 %v287
    %v340 = vpop.f32.mrf.mxu0
    %v341 = vadd.f32 0.0, %v340
    %342 = vdwg.mxu0
    %343 = vmatpush.msra.mxu0 %v77
    %344 = vmatpush.msra.mxu0 %v75
    %345 = vmatpush.msra.mxu0 %v73
    %346 = vmatpush.msra.mxu0 %v71
    %347 = vmatpush.msra.mxu0 %v69
    %348 = vmatpush.msra.mxu0 %v67
    %349 = vmatpush.msra.mxu0 %v65
    %350 = vmatpush.msra.mxu0 %v63
    %351 = vmatpush.msra.mxu0 %v61
    %352 = vmatpush.msra.mxu0 %v59
    %353 = vmatpush.msra.mxu0 %v57
    %354 = vmatpush.msra.mxu0 %v55
    %355 = vmatpush.msra.mxu0 %v53
    %356 = vmatpush.msra.mxu0 %v51
    %357 = vmatpush.msra.mxu0 %v49
    %358 = vmatpush.msra.mxu0 %v47
    %359 = vmatmul.f32.gmra.mxu0 %v256
    %v360 = vpop.f32.mrf.mxu0
    %v361 = vadd.f32 %v329, %v360
    %362 = vmatmul.f32.gmra.mxu0 %v264
    %v363 = vpop.f32.mrf.mxu0
    %v364 = vadd.f32 %v332, %v363
    %365 = vmatmul.f32.gmra.mxu0 %v272
    %v366 = vpop.f32.mrf.mxu0
    %v367 = vadd.f32 %v335, %v366
    %368 = vmatmul.f32.gmra.mxu0 %v280
    %v369 = vpop.f32.mrf.mxu0
    %v370 = vadd.f32 %v338, %v369
    %371 = vmatmul.f32.gmra.mxu0 %v288
    %v372 = vpop.f32.mrf.mxu0
    %v373 = vadd.f32 %v341, %v372
    %374 = vdwg.mxu0
    %375 = vmatpush.msra.mxu0 %v109
    %376 = vmatpush.msra.mxu0 %v107
    %377 = vmatpush.msra.mxu0 %v105
    %378 = vmatpush.msra.mxu0 %v103
    %379 = vmatpush.msra.mxu0 %v101
    %380 = vmatpush.msra.mxu0 %v99
    %381 = vmatpush.msra.mxu0 %v97
    %382 = vmatpush.msra.mxu0 %v95
    %383 = vmatpush.msra.mxu0 %v93
    %384 = vmatpush.msra.mxu0 %v91
    %385 = vmatpush.msra.mxu0 %v89
    %386 = vmatpush.msra.mxu0 %v87
    %387 = vmatpush.msra.mxu0 %v85
    %388 = vmatpush.msra.mxu0 %v83
    %389 = vmatpush.msra.mxu0 %v81
    %390 = vmatpush.msra.mxu0 %v79
    %391 = vmatmul.f32.gmra.mxu0 %v257
    %v392 = vpop.f32.mrf.mxu0
    %v393 = vadd.f32 %v361, %v392
    %394 = vmatmul.f32.gmra.mxu0 %v265
    %v395 = vpop.f32.mrf.mxu0
    %v396 = vadd.f32 %v364, %v395
    %397 = vmatmul.f32.gmra.mxu0 %v273
    %v398 = vpop.f32.mrf.mxu0
    %v399 = vadd.f32 %v367, %v398
    %400 = vmatmul.f32.gmra.mxu0 %v281
    %v401 = vpop.f32.mrf.mxu0
    %v402 = vadd.f32 %v370, %v401
    %403 = vmatmul.f32.gmra.mxu0 %v289
    %v404 = vpop.f32.mrf.mxu0
    %v405 = vadd.f32 %v373, %v404
    %406 = vdwg.mxu0
    %407 = vmatpush.msra.mxu0 %v141
    %408 = vmatpush.msra.mxu0 %v139
    %409 = vmatpush.msra.mxu0 %v137
    %410 = vmatpush.msra.mxu0 %v135
    %411 = vmatpush.msra.mxu0 %v133
    %412 = vmatpush.msra.mxu0 %v131
    %413 = vmatpush.msra.mxu0 %v129
    %414 = vmatpush.msra.mxu0 %v127
    %415 = vmatpush.msra.mxu0 %v125
    %416 = vmatpush.msra.mxu0 %v123
    %417 = vmatpush.msra.mxu0 %v121
    %418 = vmatpush.msra.mxu0 %v119
    %419 = vmatpush.msra.mxu0 %v117
    %420 = vmatpush.msra.mxu0 %v115
    %421 = vmatpush.msra.mxu0 %v113
    %422 = vmatpush.msra.mxu0 %v111
    %423 = vmatmul.f32.gmra.mxu0 %v258
    %v424 = vpop.f32.mrf.mxu0
    %v425 = vadd.f32 %v393, %v424
    %426 = vmatmul.f32.gmra.mxu0 %v266
    %v427 = vpop.f32.mrf.mxu0
    %v428 = vadd.f32 %v396, %v427
    %429 = vmatmul.f32.gmra.mxu0 %v274
    %v430 = vpop.f32.mrf.mxu0
    %v431 = vadd.f32 %v399, %v430
    %432 = vmatmul.f32.gmra.mxu0 %v282
    %v433 = vpop.f32.mrf.mxu0
    %v434 = vadd.f32 %v402, %v433
    %435 = vmatmul.f32.gmra.mxu0 %v290
    %v436 = vpop.f32.mrf.mxu0
    %v437 = vadd.f32 %v405, %v436
    %438 = vdwg.mxu0
    %439 = vmatpush.msra.mxu0 %v173
    %440 = vmatpush.msra.mxu0 %v171
    %441 = vmatpush.msra.mxu0 %v169
    %442 = vmatpush.msra.mxu0 %v167
    %443 = vmatpush.msra.mxu0 %v165
    %444 = vmatpush.msra.mxu0 %v163
    %445 = vmatpush.msra.mxu0 %v161
    %446 = vmatpush.msra.mxu0 %v159
    %447 = vmatpush.msra.mxu0 %v157
    %448 = vmatpush.msra.mxu0 %v155
    %449 = vmatpush.msra.mxu0 %v153
    %450 = vmatpush.msra.mxu0 %v151
    %451 = vmatpush.msra.mxu0 %v149
    %452 = vmatpush.msra.mxu0 %v147
    %453 = vmatpush.msra.mxu0 %v145
    %454 = vmatpush.msra.mxu0 %v143
    %455 = vmatmul.f32.gmra.mxu0 %v259
    %v456 = vpop.f32.mrf.mxu0
    %v457 = vadd.f32 %v425, %v456
    %458 = vmatmul.f32.gmra.mxu0 %v267
    %v459 = vpop.f32.mrf.mxu0
    %v460 = vadd.f32 %v428, %v459
    %461 = vmatmul.f32.gmra.mxu0 %v275
    %v462 = vpop.f32.mrf.mxu0
    %v463 = vadd.f32 %v431, %v462
    %464 = vmatmul.f32.gmra.mxu0 %v283
    %v465 = vpop.f32.mrf.mxu0
    %v466 = vadd.f32 %v434, %v465
    %467 = vmatmul.f32.gmra.mxu0 %v291
    %v468 = vpop.f32.mrf.mxu0
    %v469 = vadd.f32 %v437, %v468
    %470 = vdwg.mxu0
    %471 = vmatpush.msra.mxu0 %v205
    %472 = vmatpush.msra.mxu0 %v203
    %473 = vmatpush.msra.mxu0 %v201
    %474 = vmatpush.msra.mxu0 %v199
    %475 = vmatpush.msra.mxu0 %v197
    %476 = vmatpush.msra.mxu0 %v195
    %477 = vmatpush.msra.mxu0 %v193
    %478 = vmatpush.msra.mxu0 %v191
    %479 = vmatpush.msra.mxu0 %v189
    %480 = vmatpush.msra.mxu0 %v187
    %481 = vmatpush.msra.mxu0 %v185
    %482 = vmatpush.msra.mxu0 %v183
    %483 = vmatpush.msra.mxu0 %v181
    %484 = vmatpush.msra.mxu0 %v179
    %485 = vmatpush.msra.mxu0 %v177
    %486 = vmatpush.msra.mxu0 %v175
    %487 = vmatmul.f32.gmra.mxu0 %v260
    %v488 = vpop.f32.mrf.mxu0
    %v489 = vadd.f32 %v457, %v488
    %490 = vmatmul.f32.gmra.mxu0 %v268
    %v491 = vpop.f32.mrf.mxu0
    %v492 = vadd.f32 %v460, %v491
    %493 = vmatmul.f32.gmra.mxu0 %v276
    %v494 = vpop.f32.mrf.mxu0
    %v495 = vadd.f32 %v463, %v494
    %496 = vmatmul.f32.gmra.mxu0 %v284
    %v497 = vpop.f32.mrf.mxu0
    %v498 = vadd.f32 %v466, %v497
    %499 = vmatmul.f32.gmra.mxu0 %v292
    %v500 = vpop.f32.mrf.mxu0
    %v501 = vadd.f32 %v469, %v500
    %502 = vdwg.mxu0
    %503 = vmatpush.msra.mxu0 %v237
    %504 = vmatpush.msra.mxu0 %v235
    %505 = vmatpush.msra.mxu0 %v233
    %506 = vmatpush.msra.mxu0 %v231
    %507 = vmatpush.msra.mxu0 %v229
    %508 = vmatpush.msra.mxu0 %v227
    %509 = vmatpush.msra.mxu0 %v225
    %510 = vmatpush.msra.mxu0 %v223
    %511 = vmatpush.msra.mxu0 %v221
    %512 = vmatpush.msra.mxu0 %v219
    %513 = vmatpush.msra.mxu0 %v217
    %514 = vmatpush.msra.mxu0 %v215
    %515 = vmatpush.msra.mxu0 %v213
    %516 = vmatpush.msra.mxu0 %v211
    %517 = vmatpush.msra.mxu0 %v209
    %518 = vmatpush.msra.mxu0 %v207
    %519 = vmatmul.f32.gmra.mxu0 %v261
    %v520 = vpop.f32.mrf.mxu0
    %v521 = vadd.f32 %v489, %v520
    %522 = vmatmul.f32.gmra.mxu0 %v269
    %v523 = vpop.f32.mrf.mxu0
    %v524 = vadd.f32 %v492, %v523
    %525 = vmatmul.f32.gmra.mxu0 %v277
    %v526 = vpop.f32.mrf.mxu0
    %v527 = vadd.f32 %v495, %v526
    %528 = vmatmul.f32.gmra.mxu0 %v285
    %v529 = vpop.f32.mrf.mxu0
    %v530 = vadd.f32 %v498, %v529
    %531 = vmatmul.f32.gmra.mxu0 %v293
    %v532 = vpop.f32.mrf.mxu0
    %v533 = vadd.f32 %v501, %v532
    %534 = vdwg.mxu0
    %535 = vmatpush.msra.mxu0 0.0
    %536 = vmatpush.msra.mxu0 0.0
    %537 = vmatpush.msra.mxu0 0.0
    %538 = vmatpush.msra.mxu0 0.0
    %539 = vmatpush.msra.mxu0 0.0
    %540 = vmatpush.msra.mxu0 0.0
    %541 = vmatpush.msra.mxu0 0.0
    %542 = vmatpush.msra.mxu0 0.0
    %543 = vmatpush.msra.mxu0 %v253
    %544 = vmatpush.msra.mxu0 %v251
    %545 = vmatpush.msra.mxu0 %v249
    %546 = vmatpush.msra.mxu0 %v247
    %547 = vmatpush.msra.mxu0 %v245
    %548 = vmatpush.msra.mxu0 %v243
    %549 = vmatpush.msra.mxu0 %v241
    %550 = vmatpush.msra.mxu0 %v239
    %551 = vmatmul.f32.gmra.mxu0 %v297
    %v552 = vpop.f32.mrf.mxu0
    %v553 = vadd.f32 %v521, %v552
    %554 = vmatmul.f32.gmra.mxu0 %v300
    %v555 = vpop.f32.mrf.mxu0
    %v556 = vadd.f32 %v524, %v555
    %557 = vmatmul.f32.gmra.mxu0 %v303
    %v558 = vpop.f32.mrf.mxu0
    %v559 = vadd.f32 %v527, %v558
    %560 = vmatmul.f32.gmra.mxu0 %v306
    %v561 = vpop.f32.mrf.mxu0
    %v562 = vadd.f32 %v530, %v561
    %563 = vmatmul.f32.gmra.mxu0 %v309
    %v564 = vpop.f32.mrf.mxu0
    %v565 = vadd.f32 %v533, %v564
    %566 = vdwg.mxu0
    %567 = vmatpush.msra.mxu0 %v46
    %568 = vmatpush.msra.mxu0 %v44
    %569 = vmatpush.msra.mxu0 %v42
    %570 = vmatpush.msra.mxu0 %v40
    %571 = vmatpush.msra.mxu0 %v38
    %572 = vmatpush.msra.mxu0 %v36
    %573 = vmatpush.msra.mxu0 %v34
    %574 = vmatpush.msra.mxu0 %v32
    %575 = vmatpush.msra.mxu0 %v30
    %576 = vmatpush.msra.mxu0 %v28
    %577 = vmatpush.msra.mxu0 %v26
    %578 = vmatpush.msra.mxu0 %v24
    %579 = vmatpush.msra.mxu0 %v22
    %580 = vmatpush.msra.mxu0 %v20
    %581 = vmatpush.msra.mxu0 %v18
    %582 = vmatpush.msra.mxu0 %v16
    %583 = vmatmul.f32.gmra.mxu0 %v255
    %v584 = vpop.f32.mrf.mxu0
    %v585 = vadd.f32 0.0, %v584
    %586 = vmatmul.f32.gmra.mxu0 %v263
    %v587 = vpop.f32.mrf.mxu0
    %v588 = vadd.f32 0.0, %v587
    %589 = vmatmul.f32.gmra.mxu0 %v271
    %v590 = vpop.f32.mrf.mxu0
    %v591 = vadd.f32 0.0, %v590
    %592 = vmatmul.f32.gmra.mxu0 %v279
    %v593 = vpop.f32.mrf.mxu0
    %v594 = vadd.f32 0.0, %v593
    %595 = vmatmul.f32.gmra.mxu0 %v287
    %v596 = vpop.f32.mrf.mxu0
    %v597 = vadd.f32 0.0, %v596
    %598 = vdwg.mxu0
    %599 = vmatpush.msra.mxu0 %v78
    %600 = vmatpush.msra.mxu0 %v76
    %601 = vmatpush.msra.mxu0 %v74
    %602 = vmatpush.msra.mxu0 %v72
    %603 = vmatpush.msra.mxu0 %v70
    %604 = vmatpush.msra.mxu0 %v68
    %605 = vmatpush.msra.mxu0 %v66
    %606 = vmatpush.msra.mxu0 %v64
    %607 = vmatpush.msra.mxu0 %v62
    %608 = vmatpush.msra.mxu0 %v60
    %609 = vmatpush.msra.mxu0 %v58
    %610 = vmatpush.msra.mxu0 %v56
    %611 = vmatpush.msra.mxu0 %v54
    %612 = vmatpush.msra.mxu0 %v52
    %613 = vmatpush.msra.mxu0 %v50
    %614 = vmatpush.msra.mxu0 %v48
    %615 = vmatmul.f32.gmra.mxu0 %v256
    %v616 = vpop.f32.mrf.mxu0
    %v617 = vadd.f32 %v585, %v616
    %618 = vmatmul.f32.gmra.mxu0 %v264
    %v619 = vpop.f32.mrf.mxu0
    %v620 = vadd.f32 %v588, %v619
    %621 = vmatmul.f32.gmra.mxu0 %v272
    %v622 = vpop.f32.mrf.mxu0
    %v623 = vadd.f32 %v591, %v622
    %624 = vmatmul.f32.gmra.mxu0 %v280
    %v625 = vpop.f32.mrf.mxu0
    %v626 = vadd.f32 %v594, %v625
    %627 = vmatmul.f32.gmra.mxu0 %v288
    %v628 = vpop.f32.mrf.mxu0
    %v629 = vadd.f32 %v597, %v628
    %630 = vdwg.mxu0
    %631 = vmatpush.msra.mxu0 %v110
    %632 = vmatpush.msra.mxu0 %v108
    %633 = vmatpush.msra.mxu0 %v106
    %634 = vmatpush.msra.mxu0 %v104
    %635 = vmatpush.msra.mxu0 %v102
    %636 = vmatpush.msra.mxu0 %v100
    %637 = vmatpush.msra.mxu0 %v98
    %638 = vmatpush.msra.mxu0 %v96
    %639 = vmatpush.msra.mxu0 %v94
    %640 = vmatpush.msra.mxu0 %v92
    %641 = vmatpush.msra.mxu0 %v90
    %642 = vmatpush.msra.mxu0 %v88
    %643 = vmatpush.msra.mxu0 %v86
    %644 = vmatpush.msra.mxu0 %v84
    %645 = vmatpush.msra.mxu0 %v82
    %646 = vmatpush.msra.mxu0 %v80
    %647 = vmatmul.f32.gmra.mxu0 %v257
    %v648 = vpop.f32.mrf.mxu0
    %v649 = vadd.f32 %v617, %v648
    %650 = vmatmul.f32.gmra.mxu0 %v265
    %v651 = vpop.f32.mrf.mxu0
    %v652 = vadd.f32 %v620, %v651
    %653 = vmatmul.f32.gmra.mxu0 %v273
    %v654 = vpop.f32.mrf.mxu0
    %v655 = vadd.f32 %v623, %v654
    %656 = vmatmul.f32.gmra.mxu0 %v281
    %v657 = vpop.f32.mrf.mxu0
    %v658 = vadd.f32 %v626, %v657
    %659 = vmatmul.f32.gmra.mxu0 %v289
    %v660 = vpop.f32.mrf.mxu0
    %v661 = vadd.f32 %v629, %v660
    %662 = vdwg.mxu0
    %663 = vmatpush.msra.mxu0 %v142
    %664 = vmatpush.msra.mxu0 %v140
    %665 = vmatpush.msra.mxu0 %v138
    %666 = vmatpush.msra.mxu0 %v136
    %667 = vmatpush.msra.mxu0 %v134
    %668 = vmatpush.msra.mxu0 %v132
    %669 = vmatpush.msra.mxu0 %v130
    %670 = vmatpush.msra.mxu0 %v128
    %671 = vmatpush.msra.mxu0 %v126
    %672 = vmatpush.msra.mxu0 %v124
    %673 = vmatpush.msra.mxu0 %v122
    %674 = vmatpush.msra.mxu0 %v120
    %675 = vmatpush.msra.mxu0 %v118
    %676 = vmatpush.msra.mxu0 %v116
    %677 = vmatpush.msra.mxu0 %v114
    %678 = vmatpush.msra.mxu0 %v112
    %679 = vmatmul.f32.gmra.mxu0 %v258
    %v680 = vpop.f32.mrf.mxu0
    %v681 = vadd.f32 %v649, %v680
    %682 = vmatmul.f32.gmra.mxu0 %v266
    %v683 = vpop.f32.mrf.mxu0
    %v684 = vadd.f32 %v652, %v683
    %685 = vmatmul.f32.gmra.mxu0 %v274
    %v686 = vpop.f32.mrf.mxu0
    %v687 = vadd.f32 %v655, %v686
    %688 = vmatmul.f32.gmra.mxu0 %v282
    %v689 = vpop.f32.mrf.mxu0
    %v690 = vadd.f32 %v658, %v689
    %691 = vmatmul.f32.gmra.mxu0 %v290
    %v692 = vpop.f32.mrf.mxu0
    %v693 = vadd.f32 %v661, %v692
    %694 = vdwg.mxu0
    %695 = vmatpush.msra.mxu0 %v174
    %696 = vmatpush.msra.mxu0 %v172
    %697 = vmatpush.msra.mxu0 %v170
    %698 = vmatpush.msra.mxu0 %v168
    %699 = vmatpush.msra.mxu0 %v166
    %700 = vmatpush.msra.mxu0 %v164
    %701 = vmatpush.msra.mxu0 %v162
    %702 = vmatpush.msra.mxu0 %v160
    %703 = vmatpush.msra.mxu0 %v158
    %704 = vmatpush.msra.mxu0 %v156
    %705 = vmatpush.msra.mxu0 %v154
    %706 = vmatpush.msra.mxu0 %v152
    %707 = vmatpush.msra.mxu0 %v150
    %708 = vmatpush.msra.mxu0 %v148
    %709 = vmatpush.msra.mxu0 %v146
    %710 = vmatpush.msra.mxu0 %v144
    %711 = vmatmul.f32.gmra.mxu0 %v259
    %v712 = vpop.f32.mrf.mxu0
    %v713 = vadd.f32 %v681, %v712
    %714 = vmatmul.f32.gmra.mxu0 %v267
    %v715 = vpop.f32.mrf.mxu0
    %v716 = vadd.f32 %v684, %v715
    %717 = vmatmul.f32.gmra.mxu0 %v275
    %v718 = vpop.f32.mrf.mxu0
    %v719 = vadd.f32 %v687, %v718
    %720 = vmatmul.f32.gmra.mxu0 %v283
    %v721 = vpop.f32.mrf.mxu0
    %v722 = vadd.f32 %v690, %v721
    %723 = vmatmul.f32.gmra.mxu0 %v291
    %v724 = vpop.f32.mrf.mxu0
    %v725 = vadd.f32 %v693, %v724
    %726 = vdwg.mxu0
    %727 = vmatpush.msra.mxu0 %v206
    %728 = vmatpush.msra.mxu0 %v204
    %729 = vmatpush.msra.mxu0 %v202
    %730 = vmatpush.msra.mxu0 %v200
    %731 = vmatpush.msra.mxu0 %v198
    %732 = vmatpush.msra.mxu0 %v196
    %733 = vmatpush.msra.mxu0 %v194
    %734 = vmatpush.msra.mxu0 %v192
    %735 = vmatpush.msra.mxu0 %v190
    %736 = vmatpush.msra.mxu0 %v188
    %737 = vmatpush.msra.mxu0 %v186
    %738 = vmatpush.msra.mxu0 %v184
    %739 = vmatpush.msra.mxu0 %v182
    %740 = vmatpush.msra.mxu0 %v180
    %741 = vmatpush.msra.mxu0 %v178
    %742 = vmatpush.msra.mxu0 %v176
    %743 = vmatmul.f32.gmra.mxu0 %v260
    %v744 = vpop.f32.mrf.mxu0
    %v745 = vadd.f32 %v713, %v744
    %746 = vmatmul.f32.gmra.mxu0 %v268
    %v747 = vpop.f32.mrf.mxu0
    %v748 = vadd.f32 %v716, %v747
    %749 = vmatmul.f32.gmra.mxu0 %v276
    %v750 = vpop.f32.mrf.mxu0
    %v751 = vadd.f32 %v719, %v750
    %752 = vmatmul.f32.gmra.mxu0 %v284
    %v753 = vpop.f32.mrf.mxu0
    %v754 = vadd.f32 %v722, %v753
    %755 = vmatmul.f32.gmra.mxu0 %v292
    %v756 = vpop.f32.mrf.mxu0
    %v757 = vadd.f32 %v725, %v756
    %758 = vdwg.mxu0
    %759 = vmatpush.msra.mxu0 %v238
    %760 = vmatpush.msra.mxu0 %v236
    %761 = vmatpush.msra.mxu0 %v234
    %762 = vmatpush.msra.mxu0 %v232
    %763 = vmatpush.msra.mxu0 %v230
    %764 = vmatpush.msra.mxu0 %v228
    %765 = vmatpush.msra.mxu0 %v226
    %766 = vmatpush.msra.mxu0 %v224
    %767 = vmatpush.msra.mxu0 %v222
    %768 = vmatpush.msra.mxu0 %v220
    %769 = vmatpush.msra.mxu0 %v218
    %770 = vmatpush.msra.mxu0 %v216
    %771 = vmatpush.msra.mxu0 %v214
    %772 = vmatpush.msra.mxu0 %v212
    %773 = vmatpush.msra.mxu0 %v210
    %774 = vmatpush.msra.mxu0 %v208
    %775 = vmatmul.f32.gmra.mxu0 %v261
    %v776 = vpop.f32.mrf.mxu0
    %v777 = vadd.f32 %v745, %v776
    %778 = vmatmul.f32.gmra.mxu0 %v269
    %v779 = vpop.f32.mrf.mxu0
    %v780 = vadd.f32 %v748, %v779
    %781 = vmatmul.f32.gmra.mxu0 %v277
    %v782 = vpop.f32.mrf.mxu0
    %v783 = vadd.f32 %v751, %v782
    %784 = vmatmul.f32.gmra.mxu0 %v285
    %v785 = vpop.f32.mrf.mxu0
    %v786 = vadd.f32 %v754, %v785
    %787 = vmatmul.f32.gmra.mxu0 %v293
    %v788 = vpop.f32.mrf.mxu0
    %v789 = vadd.f32 %v757, %v788
    %790 = vdwg.mxu0
    %791 = vmatpush.msra.mxu0 0.0
    %792 = vmatpush.msra.mxu0 0.0
    %793 = vmatpush.msra.mxu0 0.0
    %794 = vmatpush.msra.mxu0 0.0
    %795 = vmatpush.msra.mxu0 0.0
    %796 = vmatpush.msra.mxu0 0.0
    %797 = vmatpush.msra.mxu0 0.0
    %798 = vmatpush.msra.mxu0 0.0
    %799 = vmatpush.msra.mxu0 %v254
    %800 = vmatpush.msra.mxu0 %v252
    %801 = vmatpush.msra.mxu0 %v250
    %802 = vmatpush.msra.mxu0 %v248
    %803 = vmatpush.msra.mxu0 %v246
    %804 = vmatpush.msra.mxu0 %v244
    %805 = vmatpush.msra.mxu0 %v242
    %806 = vmatpush.msra.mxu0 %v240
    %807 = vmatmul.f32.gmra.mxu0 %v297
    %v808 = vpop.f32.mrf.mxu0
    %v809 = vadd.f32 %v777, %v808
    %810 = vmatmul.f32.gmra.mxu0 %v300
    %v811 = vpop.f32.mrf.mxu0
    %v812 = vadd.f32 %v780, %v811
    %813 = vmatmul.f32.gmra.mxu0 %v303
    %v814 = vpop.f32.mrf.mxu0
    %v815 = vadd.f32 %v783, %v814
    %816 = vmatmul.f32.gmra.mxu0 %v306
    %v817 = vpop.f32.mrf.mxu0
    %v818 = vadd.f32 %v786, %v817
    %819 = vmatmul.f32.gmra.mxu0 %v309
    %v820 = vpop.f32.mrf.mxu0
    %v821 = vadd.f32 %v789, %v820
    %822 = vdwg.mxu0
    %vm823 = vcmask 556032
    %v824 = vsel %vm823, %v809, 0.0
    %v825 = vadd.f32 %v553, %v824
    %826 = vadd.xlane.f32.xlu0 %v825
    %v827 = vpop.xlane.xlu0 %826
    %v828 = vsel %vm823, %v812, 0.0
    %v829 = vadd.f32 %v556, %v828
    %830 = vadd.xlane.f32.xlu0 %v829
    %v831 = vpop.xlane.xlu0 %830
    %v832 = vsel %vm823, %v815, 0.0
    %v833 = vadd.f32 %v559, %v832
    %834 = vadd.xlane.f32.xlu0 %v833
    %v835 = vpop.xlane.xlu0 %834
    %v836 = vsel %vm823, %v818, 0.0
    %v837 = vadd.f32 %v562, %v836
    %838 = vadd.xlane.f32.xlu0 %v837
    %v839 = vpop.xlane.xlu0 %838
    %v840 = vsel %vm823, %v821, 0.0
    %v841 = vadd.f32 %v565, %v840
    %842 = vadd.xlane.f32.xlu0 %v841
    %v843 = vpop.xlane.xlu0 %842
    %844 = vxpose.xlu0.b32.start [1/16] %v827, 128
    %845 = vxpose.xlu0.b32.cont [2/16] %v831, 128
    %846 = vxpose.xlu0.b32.cont [3/16] %v835, 128
    %847 = vxpose.xlu0.b32.cont [4/16] %v839, 128
    %848 = vxpose.xlu0.b32.cont [5/16] %v843, 128
    %849 = vxpose.xlu0.b32.cont [6/16] 0.0, 128
    %850 = vxpose.xlu0.b32.cont [7/16] 0.0, 128
    %851 = vxpose.xlu0.b32.cont [8/16] 0.0, 128
    %852 = vxpose.xlu0.b32.cont [9/16] 0.0, 128
    %853 = vxpose.xlu0.b32.cont [10/16] 0.0, 128
    %854 = vxpose.xlu0.b32.cont [11/16] 0.0, 128
    %855 = vxpose.xlu0.b32.cont [12/16] 0.0, 128
    %856 = vxpose.xlu0.b32.cont [13/16] 0.0, 128
    %857 = vxpose.xlu0.b32.cont [14/16] 0.0, 128
    %858 = vxpose.xlu0.b32.cont [15/16] 0.0, 128
    %859 = vxpose.xlu0.b32.end [16/16] 0.0, 128
    %v860 = vpop.trf.xlu0
    %v861 = vpop.trf.xlu0
    %v862 = vpop.trf.xlu0
    %v863 = vpop.trf.xlu0
    %v864 = vpop.trf.xlu0
    %v865 = vpop.trf.xlu0
    %v866 = vpop.trf.xlu0
    %v867 = vpop.trf.xlu0
    %v868 = vpop.trf.xlu0
    %v869 = vpop.trf.xlu0
    %v870 = vpop.trf.xlu0
    %v871 = vpop.trf.xlu0
    %v872 = vpop.trf.xlu0
    %v873 = vpop.trf.xlu0
    %v874 = vpop.trf.xlu0
    %v875 = vpop.trf.xlu0
    %v876 = vmul.f32 %v860, 0.0051020407
    %v877 = vld [vmem:[%s2] sm:$0x1]
    %v878 = vadd.f32 %v876, %v877
    %vm879 = vcmask 319488
    %880 = vst.msk [vmem:[#allocation2] sm:$0x1] %vm879, %v878
    // Predicated region
    $region14: #{tpu_custom_call.1} parent=1 // pred_check
      _
    $region15: #{tpu_custom_call.1} parent=1 // pred_check_branch
      %882 = sbr.rel (0) target = $region17
    $region16: #{tpu_custom_call.1} parent=1 // pred_region
      %884 = vsyncadd [#allocation3], 0
      %s886 = sshll.u32 [#allocation2], 4
      %s887 = int_to_ptr.vmem [resolvable:$true] %s886
      %s888 = sshll.u32 %s3, 4
      %s889 = int_to_ptr.hbm [resolvable:$true] %s888
      %891 = dma.vmem_to_hbm [thread:$0]  %s887, 16, %s889, [#allocation3]
    $region17: #{tpu_custom_call.1} parent=1 // pred_fallthru
      _
    // Predicated region
    $region18: #{tpu_custom_call.1} parent=1 // pred_check
      _
    $region19: #{tpu_custom_call.1} parent=1 // pred_check_branch
      %893 = sbr.rel (0) target = $region21
    $region20: #{tpu_custom_call.1} parent=1 // pred_region
      %895 = dma.done [#allocation3], 16
    $region21: #{tpu_custom_call.1} parent=1 // pred_fallthru
      _
    %896 = vsyncpa [#allocation3], 1

</llo_original>
